<compile_context>
chip_gen: v7x
topology: tpu7x:2x2x1
jax: 0.10.0
libtpu: 0.0.40
codegen_flags: <defaults>
</compile_context>

<pallas_src>
import jax
import jax.numpy as jnp
from jax.experimental import pallas as pl
from jax.experimental.pallas import tpu as pltpu


_LANE = 128       # vreg lane width
_SUBLANE = 8      # vreg sublane count (f32)


# --------------------------------------------------------------------------
# Kernel bodies
# --------------------------------------------------------------------------

def _sum_full_c_kernel(x_ref, o_ref):
    """Full channel axis in one block: single fused reduce + store.

    x_ref: (bt, C, ts); o_ref: (bt, ts).
    """
    o_ref[...] = jnp.sum(x_ref[...], axis=1, dtype=jnp.float32).astype(o_ref.dtype)


def _sum_split_c_inplace_kernel(x_ref, o_ref):
    """Channel axis split, f32 output: accumulate directly into o_ref.

    o_ref's index_map ignores the k axis, so its VMEM block is resident across
    the reduction; no scratch and no finalize copy needed.
    """
    k = pl.program_id(2)
    partial = jnp.sum(x_ref[...], axis=1, dtype=jnp.float32)

    @pl.when(k == 0)
    def _init():
        o_ref[...] = partial

    @pl.when(k > 0)
    def _accum():
        o_ref[...] += partial


def _sum_split_c_scratch_kernel(x_ref, o_ref, acc_ref):
    """Channel axis split, non-f32 output: accumulate in an f32 scratch."""
    k = pl.program_id(2)

    @pl.when(k == 0)
    def _init():
        acc_ref[...] = jnp.zeros_like(acc_ref)

    acc_ref[...] += jnp.sum(x_ref[...], axis=1, dtype=jnp.float32)

    @pl.when(k == pl.num_programs(2) - 1)
    def _finalize():
        o_ref[...] = acc_ref[...].astype(o_ref.dtype)


# --------------------------------------------------------------------------
# Tiling / budget helpers
# --------------------------------------------------------------------------

def _sublane_unit(dtype):
    """8 rows/vreg for f32, 16 for bf16, 32 for int8/fp8 (sublane packing)."""
    itemsize = jnp.dtype(dtype).itemsize
    packing = max(1, 4 // max(1, itemsize))
    return _SUBLANE * packing


def _vmem_budget():
    """(physical VMEM capacity, per-grid-step footprint budget)."""
    capacity = 64 * 1024 * 1024            # conservative default = v7x per-TC VMEM
    try:
        info = pltpu.get_tpu_info()
        cap = getattr(info, "vmem_capacity_bytes", None)
        if cap:
            capacity = int(cap)
    except Exception:
        pass
    # Keep the live pipeline footprint well under the per-core VMEM:
    # v7x (64 MiB) -> 16 MiB/step, v5e/v6e (128 MiB) -> 24 MiB/step.
    budget = min(capacity // 4, 24 * 1024 * 1024)
    return capacity, budget


def _step_bytes(bt, ck, ts, in_bytes, out_bytes, needs_acc, needs_upcast):
    """VMEM live bytes for one grid step (pipeline double-buffering included)."""
    n = 2 * bt * ck * ts * in_bytes        # double-buffered input block
    n += 2 * bt * ts * out_bytes           # double-buffered output block
    if needs_acc:
        n += bt * ts * 4                   # single-buffered f32 accumulator
    if needs_upcast:
        n += bt * ck * ts * 4              # possible f32 temp for narrow inputs
    return n


def _spatial_tile_options(S):
    """Lane-dense spatial tile candidates, largest first."""
    if S <= _LANE:
        return [S]                         # full (last) array dim — always legal
    hi = (S // _LANE) * _LANE              # largest multiple of 128 <= S
    return list(range(hi, 0, -_LANE))      # cdiv grid handles a partial tail


def _pick_tiles(B, C, S, in_dtype, out_dtype, budget):
    """Pick (bt, ck, ts) block sizes under the VMEM budget."""
    in_bytes = jnp.dtype(in_dtype).itemsize
    out_bytes = jnp.dtype(out_dtype).itemsize
    in_sub = _sublane_unit(in_dtype)
    out_sub = _sublane_unit(out_dtype)
    needs_upcast = in_bytes < 4
    out_is_f32 = jnp.dtype(out_dtype) == jnp.dtype(jnp.float32)

    ts_opts = _spatial_tile_options(S)
    ck_opts = [C] + [d for d in range((C // in_sub) * in_sub, 0, -in_sub)
                     if C % d == 0 and d != C]
    bt_opts = [B] + [d for d in range((B // out_sub) * out_sub, 0, -out_sub)
                     if B % d == 0 and d != B]
    if 1 not in bt_opts:
        bt_opts.append(1)

    best_key, best = None, None
    for ck in ck_opts:
        needs_acc = (ck != C) and (not out_is_f32)
        for ts in ts_opts:
            for bt in bt_opts:
                fp = _step_bytes(bt, ck, ts, in_bytes, out_bytes,
                                 needs_acc, needs_upcast)
                if fp > budget:
                    continue
                steps = pl.cdiv(B, bt) * pl.cdiv(S, ts)
                key = (
                    ck == C,                        # prefer no channel split
                    steps >= 2,                     # keep both v7x TCs busy
                    bt == B or bt % out_sub == 0,   # clean output sublane blocks
                    ts,                             # bigger lane-dense tiles
                    ck,
                    bt,
                )
                if best_key is None or key > best_key:
                    best_key, best = key, (bt, ck, ts)
    if best is not None:
        return best
    # Extreme fallback: minimal block (only reachable for pathological C).
    return 1, ck_opts[-1], min(S, _LANE)


# --------------------------------------------------------------------------
# Public entry point
# --------------------------------------------------------------------------

def sum_layer(H):
    """Pallas equivalent of torch.sum(H, 1): reduce dim 1, keep all others."""
    B, C = H.shape[0], H.shape[1]
    trailing = H.shape[2:]
    S = 1
    for d in trailing:
        S *= d

    x = H.reshape(B, C, S)
    out_dtype = H.dtype
    # TODO(synk): torch.sum promotes integer inputs to int64; we keep H.dtype.
    in_bytes = jnp.dtype(x.dtype).itemsize
    out_bytes = jnp.dtype(out_dtype).itemsize
    out_is_f32 = jnp.dtype(out_dtype) == jnp.dtype(jnp.float32)
    needs_upcast = in_bytes < 4

    vmem_capacity, budget = _vmem_budget()
    bt, ck, ts = _pick_tiles(B, C, S, x.dtype, out_dtype, budget)

    gb = pl.cdiv(B, bt)       # bt always divides B by construction
    gs = pl.cdiv(S, ts)       # spatial axis may have a partial tail block
    gk = C // ck              # ck always divides C by construction

    needs_acc = (gk > 1) and (not out_is_f32)
    footprint = _step_bytes(bt, ck, ts, in_bytes, out_bytes, needs_acc, needs_upcast)
    vmem_limit = int(min(vmem_capacity * 3 // 4,
                         max(2 * footprint, 16 * 1024 * 1024)))

    if gk == 1:
        kernel = _sum_full_c_kernel
        grid = (gb, gs)
        in_specs = [pl.BlockSpec((bt, C, ts), lambda b, s: (b, 0, s))]
        out_specs = pl.BlockSpec((bt, ts), lambda b, s: (b, s))
        scratch_shapes = []
        dims = ("parallel", "parallel")
    else:
        grid = (gb, gs, gk)   # reduction (channel) axis innermost
        in_specs = [pl.BlockSpec((bt, ck, ts), lambda b, s, k: (b, k, s))]
        out_specs = pl.BlockSpec((bt, ts), lambda b, s, k: (b, s))
        dims = ("parallel", "parallel", "arbitrary")
        if out_is_f32:
            kernel = _sum_split_c_inplace_kernel
            scratch_shapes = []
        else:
            kernel = _sum_split_c_scratch_kernel
            scratch_shapes = [pltpu.VMEM((bt, ts), jnp.float32)]

    out = pl.pallas_call(
        kernel,
        out_shape=jax.ShapeDtypeStruct((B, S), out_dtype),
        grid_spec=pltpu.PrefetchScalarGridSpec(
            num_scalar_prefetch=0,
            grid=grid,
            in_specs=in_specs,
            out_specs=out_specs,
            scratch_shapes=scratch_shapes,
        ),
        compiler_params=pltpu.CompilerParams(
            dimension_semantics=dims,
            vmem_limit_bytes=vmem_limit,
        ),
    )(x)

    return out.reshape((B,) + trailing)


if __name__ == "__main__":
    key = jax.random.PRNGKey(0)
    # Small NCHW input: batch=2, channels=4, spatial=16x16
    x = jax.random.normal(key, (2, 4, 16, 16), dtype=jnp.float32)

    out = sum_layer(x)
    jax.block_until_ready(out)

    # Sanity check against plain JAX reduction (same semantics as torch.sum(H, 1))
    ref = jnp.sum(x, axis=1)
    assert out.shape == ref.shape == (2, 16, 16)
    assert jnp.allclose(out, ref, atol=1e-5, rtol=1e-5)

    print("KERNEL_OK")
</pallas_src>

<mosaic_0001>
module attributes {stable_mosaic.version = 11 : i64} {
  func.func @_sum_full_c_kernel(%arg0: i32, %arg1: i32, %arg2: memref<2x4x128xf32, #tpu.memory_space<vmem>>, %arg3: memref<2x128xf32, #tpu.memory_space<vmem>>) attributes {dimension_semantics = [#tpu.dimension_semantics<parallel>, #tpu.dimension_semantics<parallel>], iteration_bounds = array<i64: 1, 2>, scalar_prefetch = 0 : i64, scratch_operands = 0 : i64, tpu.core_type = #tpu.core_type<tc>, window_params = [{transform_indices = @transform_0, window_bounds = array<i64: 2, 4, 128>}, {transform_indices = @transform_1, window_bounds = array<i64: 2, 128>}]} {
    %c0 = arith.constant 0 : index
    %c0_0 = arith.constant 0 : index
    %c0_1 = arith.constant 0 : index
    %0 = vector.load %arg2[%c0, %c0_0, %c0_1] : memref<2x4x128xf32, #tpu.memory_space<vmem>>, vector<2x4x128xf32>
    %cst = arith.constant dense<0.000000e+00> : vector<2x128xf32>
    %1 = vector.multi_reduction <add>, %0, %cst [1] : vector<2x4x128xf32> to vector<2x128xf32>
    %c0_2 = arith.constant 0 : index
    %c0_3 = arith.constant 0 : index
    %2 = vector.load %arg3[%c0_2, %c0_3] : memref<2x128xf32, #tpu.memory_space<vmem>>, vector<2x128xf32>
    tpu.vector_store %arg3[%c0_2, %c0_3], %1 {strides = array<i32>} : memref<2x128xf32, #tpu.memory_space<vmem>>, vector<2x128xf32>,
    return
  }
  func.func @transform_0(%arg0: i32, %arg1: i32) -> (i32, i32, i32) {
    %c0_i32 = arith.constant 0 : i32
    %c0_i32_0 = arith.constant 0 : i32
    return %arg0, %c0_i32, %arg1 : i32, i32, i32
  }
  func.func @transform_1(%arg0: i32, %arg1: i32) -> (i32, i32) {
    %c0_i32 = arith.constant 0 : i32
    return %arg0, %arg1 : i32, i32
  }
}

</mosaic_0001>

<llo_original>
// kernel: tpu_custom_call.1
$region0: #{tpu_custom_call.1}
  #allocation0 [shape = 'u32[]', space=smem, size = 0x4, offset = 0x4, fixed_abs, tag = 'smem constant byte address 0x4 - core index']
  #allocation1 [shape = 'u32[144,128]{1,0:T(1,128)}', space=vmem, size = 0x12000, scoped, tag = 'internal scratch']
  %s0 = inlined_call_operand.hbm [shape: f32[2,4,256], index: 0, kind: input, shape index: {}]
  %s1 = inlined_call_operand.hbm [shape: f32[2,256], index: 1, kind: output, shape index: {}]
  %s2 = sld [smem:[#allocation0]]
  $region41: #{tpu_custom_call.1} parent=0
    _
  %s4 = ssub.s32 1, %s2
  %s5 = scalar_select 0, %s4, %s2
  $region1: #{tpu_custom_call.1} parent=0
    #allocation2 [shape = 'u8[8192]{0}', space=vmem, size = 0x2000, scoped, tag = 'input window, operand 0']
    #allocation3 [shape = 's32[2]{0}', space=sflag, size = 0x8, scoped, tag = 'scoped memory for tpu_custom_call.1']
    #allocation4 [shape = 's32[2]{0}', space=sflag, size = 0x8, scoped, tag = 'scoped memory for tpu_custom_call.1']
    #allocation5 [shape = 'u8[2048]{0}', space=vmem, size = 0x800, scoped, tag = 'output window, operand 0']
    %6 = vsyncpa [#allocation3], 0
    %s7 = scalar_lea.sflag [#allocation3], 1
    %8 = vsyncpa %s7, 0
    %9 = vsyncpa [#allocation4], 0
    %s10 = scalar_lea.sflag [#allocation4], 1
    %11 = vsyncpa %s10, 0
    loop: start=0, step=1, limit=4
    $region2: #{tpu_custom_call.1} parent=1 // loop_pre_header
      _
    $region3: #{tpu_custom_call.1} parent=1 // loop_header
      %s13 = sphi 0, %s17
      %p14 = scmp.ge.s32.totalorder %s13, 4
      %s20 = sphi 0, %s32
      %s21 = sphi 0, %s28
      %s22 = sphi 0, %s20
      %s23 = sphi 0, %s21
      %s24 = sphi 0, %s22
      %s25 = sphi 0, %s23
      %s37 = sphi 0, %s39
      %s40 = sphi 0, %s37
      %s41 = sphi 0, %s40
      %s57 = sphi 0, %s41
      %s65 = sphi 0, %s67
      %s68 = sphi 0, %s65
      %s69 = sphi 0, %s68
      %s85 = sphi 0, %s69
    $region4: #{tpu_custom_call.1} parent=1 // loop_header_branch
      %16 = sbr.rel (%p14) target = $region8
    $region5: #{tpu_custom_call.1} parent=1 // loop_body
      %s18 = ssub.s32 %s13, 1
      %s19 = ssub.s32 %s13, 2
      %s26 = sadd.s32 1, %s21
      %p27 = scmp.ge.s32.totalorder %s26, 2
      %s28 = scalar_select %p27, 0, %s26
      %s29 = sadd.s32 1, %s20
      %s30 = scalar_select %p27, %s29, %s20
      %p31 = scmp.ge.s32.totalorder %s30, 1
      %s32 = scalar_select %p31, 0, %s30
      %s33 = ssub.s32 %s20, %s32
      %s34 = ssub.s32 %s21, %s28
      %s35 = sor.u32 %s33, %s34
      %p36 = scmp.eq.s32.totalorder %s35, 0
      %s38 = sadd.s32 %s37, 1
      %s39 = scalar_select %p36, %s37, %s38
      %p42 = pneg %p36
      %p43 = scmp.eq.s32.totalorder %s13, 1
      %p44 = por %p42, %p43
      %p45 = scmp.ne.s32.totalorder %s37, %s40
      %p46 = scmp.eq.s32.totalorder %s13, 0
      %p47 = por %p45, %p46
      %p48 = scmp.ne.s32.totalorder %s37, %s40
      %p49 = scmp.eq.s32.totalorder %s18, 1
      %p50 = por %p48, %p49
      %p51 = scmp.ne.s32.totalorder %s40, %s41
      %p52 = scmp.eq.s32.totalorder %s18, 0
      %p53 = por %p51, %p52
      %p54 = scmp.ne.s32.totalorder %s40, %s41
      %p55 = scmp.eq.s32.totalorder %s19, 1
      %p56 = por %p54, %p55
      %p58 = scmp.ne.s32.totalorder %s41, %s57
      %p59 = scmp.eq.s32.totalorder %s19, 0
      %p60 = por %p58, %p59
      %s61 = ssub.s32 %s20, %s32
      %s62 = ssub.s32 %s21, %s28
      %s63 = sor.u32 %s61, %s62
      %p64 = scmp.eq.s32.totalorder %s63, 0
      %s66 = sadd.s32 %s65, 1
      %s67 = scalar_select %p64, %s65, %s66
      %p70 = pneg %p64
      %p71 = scmp.eq.s32.totalorder %s13, 1
      %p72 = por %p70, %p71
      %p73 = scmp.ne.s32.totalorder %s65, %s68
      %p74 = scmp.eq.s32.totalorder %s13, 0
      %p75 = por %p73, %p74
      %p76 = scmp.ne.s32.totalorder %s65, %s68
      %p77 = scmp.eq.s32.totalorder %s18, 1
      %p78 = por %p76, %p77
      %p79 = scmp.ne.s32.totalorder %s68, %s69
      %p80 = scmp.eq.s32.totalorder %s18, 0
      %p81 = por %p79, %p80
      %p82 = scmp.ne.s32.totalorder %s68, %s69
      %p83 = scmp.eq.s32.totalorder %s19, 1
      %p84 = por %p82, %p83
      %p86 = scmp.ne.s32.totalorder %s69, %s85
      %p87 = scmp.eq.s32.totalorder %s19, 0
      %p88 = por %p86, %p87
      %p89 = scmp.le.s32.totalorder 1, %s13
      %p90 = scmp.lt.s32.totalorder %s13, 3
      %p91 = pnand %p89, %p90
      %p92 = pneg %p91
      // Predicated region
      $region9: #{tpu_custom_call.1} parent=5 // pred_check
        _
      $region10: #{tpu_custom_call.1} parent=5 // pred_check_branch
        %94 = sbr.rel (%p91) target = $region12
      $region11: #{tpu_custom_call.1} parent=5 // pred_region
        %s95 = ssub.s32 %s13, 1
      $region12: #{tpu_custom_call.1} parent=5 // pred_fallthru
        _
      %p96 = scmp.lt.s32.totalorder %s13, 2
      // Predicated region
      $region13: #{tpu_custom_call.1} parent=5 // pred_check
        %p97 = pneg %p96
      $region14: #{tpu_custom_call.1} parent=5 // pred_check_branch
        %99 = sbr.rel (%p97) target = $region16
      $region15: #{tpu_custom_call.1} parent=5 // pred_region
        // Predicated region
        $region17: #{tpu_custom_call.1} parent=15 // pred_check
          %p100 = pneg %p47
        $region18: #{tpu_custom_call.1} parent=15 // pred_check_branch
          %102 = sbr.rel (%p100) target = $region20
        $region19: #{tpu_custom_call.1} parent=15 // pred_region
          %s103 = sand.u32 %s37, 1
          %s104 = scalar_lea.sflag [#allocation3], %s103
          %s105 = sand.u32 %s37, 1
          %s106 = smul.addr %s105, 8
          %s107 = scalar_lea.vmem [#allocation2], %s106
          %s108 = smul.u32 2, %s20
          %s110 = ssub.s32 128, 128
          %111 = vsyncadd %s104, %s110
          %s112 = smul.addr %s108, 2
          %s113 = sadd.s32 %s21, %s112
          %s114 = smul.addr %s113, 64
          %s115 = scalar_lea.hbm %s0, %s114
          %s116 = sshll.u32 %s107, 4
          %s117 = int_to_ptr.vmem [resolvable:$true] %s116
          %122 = dma.hbm_to_vmem [thread:$0]  %s115, 128, %s117, %s104, 128, 64, 4
        $region20: #{tpu_custom_call.1} parent=15 // pred_fallthru
          _
      $region16: #{tpu_custom_call.1} parent=5 // pred_fallthru
        _
      %p123 = scmp.le.s32.totalorder 1, %s13
      %p124 = scmp.lt.s32.totalorder %s13, 3
      %p125 = pnand %p123, %p124
      %p126 = pneg %p125
      // Predicated region
      $region21: #{tpu_custom_call.1} parent=5 // pred_check
        _
      $region22: #{tpu_custom_call.1} parent=5 // pred_check_branch
        %128 = sbr.rel (%p125) target = $region24
      $region23: #{tpu_custom_call.1} parent=5 // pred_region
        %s129 = ssub.s32 %s13, 1
        %s130 = sand.u32 %s40, 1
        %s131 = scalar_lea.sflag [#allocation3], %s130
        %s132 = sand.u32 %s40, 1
        %s133 = smul.addr %s132, 8
        %s134 = scalar_lea.vmem [#allocation2], %s133
        // Predicated region
        $region25: #{tpu_custom_call.1} parent=23 // pred_check
          %p135 = pneg %p53
        $region26: #{tpu_custom_call.1} parent=23 // pred_check_branch
          %137 = sbr.rel (%p135) target = $region28
        $region27: #{tpu_custom_call.1} parent=23 // pred_region
          %138 = dma.done %s131, 128
        $region28: #{tpu_custom_call.1} parent=23 // pred_fallthru
          _
        %s139 = sand.u32 %s40, 1
        %s140 = scalar_lea.sflag [#allocation3], %s139
        %s141 = sand.u32 %s40, 1
        %s142 = smul.addr %s141, 8
        %s143 = scalar_lea.vmem [#allocation2], %s142
        %p144 = pneg %p53
        %p145 = pneg %p50
        %p146 = pneg %p81
        %p147 = pneg %p78
        %s148 = sand.u32 %s68, 1
        %s149 = scalar_lea.sflag [#allocation4], %s148
        %s150 = sand.u32 %s68, 1
        %s151 = smul.addr %s150, 2
        %s152 = scalar_lea.vmem [#allocation5], %s151
        %s153 = smul.u32 2, %s22
        %v154 = vld [vmem:[%s134] sm:$0xf]
        %v155 = vld [vmem:[%s134 + $0x4] sm:$0xf]
        %vm156 = vcmask 1043456
        %v157 = vsel %vm156, %v154, 0.0
        %v158 = vrot.slane %v157, 4
        %v159 = vadd.f32 %v157, %v158
        %v160 = vrot.slane %v159, 2
        %v161 = vadd.f32 %v159, %v160
        %v162 = vrot.slane %v161, 1
        %v163 = vadd.f32 %v161, %v162
        %v164 = vsel %vm156, %v155, 0.0
        %v165 = vrot.slane %v164, 4
        %v166 = vadd.f32 %v164, %v165
        %v167 = vrot.slane %v166, 2
        %v168 = vadd.f32 %v166, %v167
        %v169 = vrot.slane %v168, 1
        %v170 = vadd.f32 %v168, %v169
        %vm173 = vcmask 1041409
        %v174 = vsel %vm173, %v170, %v163
        %176 = vst [vmem:[%s152] sm:$0x3] %v174
        %s177 = sand.u32 %s68, 1
        %s178 = scalar_lea.sflag [#allocation4], %s177
        %s179 = sand.u32 %s68, 1
        %s180 = smul.addr %s179, 2
        %s181 = scalar_lea.vmem [#allocation5], %s180
        // Predicated region
        $region29: #{tpu_custom_call.1} parent=23 // pred_check
          %p182 = pneg %p78
        $region30: #{tpu_custom_call.1} parent=23 // pred_check_branch
          %184 = sbr.rel (%p182) target = $region32
        $region31: #{tpu_custom_call.1} parent=23 // pred_region
          %s186 = ssub.s32 32, 32
          %187 = vsyncadd %s178, %s186
          %s188 = smul.addr %s22, 2
          %s189 = sadd.s32 %s23, %s188
          %s190 = smul.addr %s189, 32
          %s191 = scalar_lea.hbm %s1, %s190
          %s193 = sshll.u32 %s181, 4
          %s194 = int_to_ptr.vmem [resolvable:$true] %s193
          %196 = dma.vmem_to_hbm [thread:$0]  %s194, 32, %s191, %s178
        $region32: #{tpu_custom_call.1} parent=23 // pred_fallthru
          _
      $region24: #{tpu_custom_call.1} parent=5 // pred_fallthru
        _
      %p197 = scmp.le.s32.totalorder 2, %s13
      // Predicated region
      $region33: #{tpu_custom_call.1} parent=5 // pred_check
        %p198 = pneg %p197
      $region34: #{tpu_custom_call.1} parent=5 // pred_check_branch
        %200 = sbr.rel (%p198) target = $region36
      $region35: #{tpu_custom_call.1} parent=5 // pred_region
        %s201 = ssub.s32 %s13, 2
        // Predicated region
        $region37: #{tpu_custom_call.1} parent=35 // pred_check
          %p202 = pneg %p84
        $region38: #{tpu_custom_call.1} parent=35 // pred_check_branch
          %204 = sbr.rel (%p202) target = $region40
        $region39: #{tpu_custom_call.1} parent=35 // pred_region
          %s205 = sand.u32 %s69, 1
          %s206 = scalar_lea.sflag [#allocation4], %s205
          %s207 = sand.u32 %s69, 1
          %s208 = smul.addr %s207, 2
          %s209 = scalar_lea.vmem [#allocation5], %s208
          %210 = dma.done %s206, 32
        $region40: #{tpu_custom_call.1} parent=35 // pred_fallthru
          _
      $region36: #{tpu_custom_call.1} parent=5 // pred_fallthru
        _
    $region6: #{tpu_custom_call.1} parent=1 // loop_footer
      %s17 = sadd.s32 1, %s13
    $region7: #{tpu_custom_call.1} parent=1 // loop_footer_branch
      %12 = sbr.rel target = $region3
    $region8: #{tpu_custom_call.1} parent=1 // loop_exit
      _
    %211 = vsyncpa [#allocation3], 1
    %s212 = scalar_lea.sflag [#allocation3], 1
    %213 = vsyncpa %s212, 1
    %214 = vsyncpa [#allocation4], 1
    %s215 = scalar_lea.sflag [#allocation4], 1
    %216 = vsyncpa %s215, 1

</llo_original>
